<compile_context>
chip_gen: v7x
topology: tpu7x:2x2x1
jax: 0.10.0
libtpu: 0.0.40
codegen_flags: <defaults>
</compile_context>

<pallas_src>
import functools

import jax
import jax.numpy as jnp
from jax.experimental import pallas as pl
from jax.experimental.pallas import tpu as pltpu

_LANES = 128
_SUBLANES = 8


def _pinball_kernel(out_ref, tgt_ref, var_ref, part_ref, *,
                    rows, tr, n_inner, n_blocks):
    c = pl.program_id(0)   # outer split ("parallel"; per-TC on multi-core chips)
    i = pl.program_id(1)   # inner reduction step ("arbitrary")
    blk = c * n_inner + i

    @pl.when(i == 0)
    def _init():
        part_ref[...] = jnp.zeros_like(part_ref)

    def tile_loss():
        o = out_ref[...].astype(jnp.float32)
        t = tgt_ref[...].astype(jnp.float32)
        v = var_ref[...].astype(jnp.float32)
        d = t - o
        # Exact identity: pinball(q=.1) + pinball(q=.9) == max(|d|, |v|) - 0.8*v
        return jnp.maximum(jnp.abs(d), jnp.abs(v)) - 0.8 * v

    is_real = blk < n_blocks              # clamped phantom blocks skip compute
    overhangs = (blk + 1) * tr > rows     # only the boundary block needs a mask

    @pl.when(is_real & jnp.logical_not(overhangs))
    def _full():
        loss = tile_loss()
        # (tr,128) -> (8,128): pure cross-vreg VPU adds, no scalar reductions.
        part_ref[...] += loss.reshape(-1, _SUBLANES, _LANES).sum(axis=0)

    @pl.when(is_real & overhangs)
    def _partial():
        loss = tile_loss()
        # Row-level mask: the overhanging rows of the boundary block hold
        # undefined VMEM contents; the select zeroes them (NaNs cannot leak).
        row = jax.lax.broadcasted_iota(jnp.int32, (tr, _LANES), 0)
        loss = jnp.where(blk * tr + row < rows, loss, 0.0)
        part_ref[...] += loss.reshape(-1, _SUBLANES, _LANES).sum(axis=0)


def _default_num_splits():
    # 2 TensorCores per chip only on v7x; v5e / v6e have a single TC.
    try:
        kind = jax.devices()[0].device_kind.lower()
        return 2 if "v7" in kind else 1
    except Exception:
        return 1


def pinball_loss(output_o, target_o, var_o, *, max_rows_per_tile=4096,
                 num_splits=None):
    assert output_o.shape == target_o.shape == var_o.shape
    n_elems = output_o.size
    assert n_elems > 0
    if num_splits is None:
        num_splits = _default_num_splits()

    pad_unit = _SUBLANES * _LANES  # 1024: rows become a multiple of 8

    def to_slab(x):
        flat = jnp.ravel(x)                 # no dtype cast; native dtype in HBM
        rem = flat.size % pad_unit
        if rem:                             # <=1023-elem zero tail pad;
            flat = jnp.pad(flat, (0, pad_unit - rem))   # pinball(0,0,0) == 0
        return flat.reshape(-1, _LANES)

    o_s, t_s, v_s = to_slab(output_o), to_slab(target_o), to_slab(var_o)
    rows = o_s.shape[0]                     # multiple of 8 by construction

    tr = min(rows, max_rows_per_tile)       # multiple of 8 by construction
    n_blocks = pl.cdiv(rows, tr)
    num_splits = max(1, min(num_splits, n_blocks))
    n_inner = pl.cdiv(n_blocks, num_splits)

    def in_map(c, i):
        # Clamp so the DMA window never starts out of bounds; fully-phantom
        # logical blocks skip compute inside the kernel.
        return (jnp.minimum(c * n_inner + i, n_blocks - 1), 0)

    in_spec = pl.BlockSpec((tr, _LANES), in_map)
    kernel = functools.partial(_pinball_kernel, rows=rows, tr=tr,
                               n_inner=n_inner, n_blocks=n_blocks)

    partials = pl.pallas_call(
        kernel,
        out_shape=jax.ShapeDtypeStruct((num_splits * _SUBLANES, _LANES),
                                       jnp.float32),
        grid_spec=pltpu.PrefetchScalarGridSpec(
            num_scalar_prefetch=0,
            grid=(num_splits, n_inner),
            in_specs=[in_spec, in_spec, in_spec],
            # index_map ignores i -> the output block stays VMEM-resident across
            # the inner "arbitrary" axis and acts as a per-split accumulator.
            out_specs=pl.BlockSpec((_SUBLANES, _LANES), lambda c, i: (c, 0)),
        ),
        compiler_params=pltpu.CompilerParams(
            dimension_semantics=("parallel", "arbitrary"),
            vmem_limit_bytes=32 * 1024 * 1024,
        ),
    )(o_s, t_s, v_s)

    # mean(loss_10) + mean(loss_90) == sum(loss_10 + loss_90) / N
    return jnp.sum(partials) / jnp.float32(n_elems)


def pinball_loss_ref(output_o, target_o, var_o):
    q1, q9 = 0.1, 0.9
    q_10 = target_o - (output_o - var_o)
    q_90 = target_o - (output_o + var_o)
    loss_10 = jnp.maximum(q1 * q_10, (q1 - 1.0) * q_10)
    loss_90 = jnp.maximum(q9 * q_90, (q9 - 1.0) * q_90)
    return jnp.mean(loss_10) + jnp.mean(loss_90)


if __name__ == "__main__":
    root = jax.random.PRNGKey(0)

    def check(shape, tag):
        k1, k2, k3 = jax.random.split(jax.random.fold_in(root, tag), 3)
        o = jax.random.normal(k1, shape, dtype=jnp.float32)
        t = jax.random.normal(k2, shape, dtype=jnp.float32)
        v = jax.nn.softplus(jax.random.normal(k3, shape, dtype=jnp.float32))
        got = jax.block_until_ready(pinball_loss(o, t, v))
        ref = pinball_loss_ref(o, t, v)
        assert jnp.allclose(got, ref, atol=1e-5, rtol=1e-4), (shape, got, ref)

    check((2, 4, 16, 16), 0)    # primary small NCHW-like case
    check((5, 7, 13), 1)        # ragged: tail pad path, single tile
    check((5, 1024, 128), 2)    # multi-block: interior + partial boundary block
    check((3, 4096, 128), 3)    # multiple full blocks; phantom block when split
    print("KERNEL_OK")
</pallas_src>

<mosaic_0001>
module attributes {stable_mosaic.version = 11 : i64} {
  func.func @_pinball_kernel(%arg0: i32, %arg1: i32, %arg2: memref<16x128xf32, #tpu.memory_space<vmem>>, %arg3: memref<16x128xf32, #tpu.memory_space<vmem>>, %arg4: memref<16x128xf32, #tpu.memory_space<vmem>>, %arg5: memref<8x128xf32, #tpu.memory_space<vmem>>) attributes {dimension_semantics = [#tpu.dimension_semantics<parallel>, #tpu.dimension_semantics<arbitrary>], iteration_bounds = array<i64: 1, 1>, scalar_prefetch = 0 : i64, scratch_operands = 0 : i64, tpu.core_type = #tpu.core_type<tc>, window_params = [{transform_indices = @transform_0, window_bounds = array<i64: 16, 128>}, {transform_indices = @transform_1, window_bounds = array<i64: 16, 128>}, {transform_indices = @transform_2, window_bounds = array<i64: 16, 128>}, {transform_indices = @transform_3, window_bounds = array<i64: 8, 128>}]} {
    %c1_i32 = arith.constant 1 : i32
    %0 = arith.muli %arg0, %c1_i32 : i32
    %1 = arith.addi %0, %arg1 : i32
    %c0_i32 = arith.constant 0 : i32
    %2 = arith.cmpi eq, %arg1, %c0_i32 : i32
    %3 = arith.extui %2 : i1 to i32
    %c0_i32_0 = arith.constant 0 : i32
    %4 = arith.cmpi ne, %3, %c0_i32_0 : i32
    scf.if %4 {
      %cst = arith.constant 0.000000e+00 : f32
      %16 = vector.broadcast %cst : f32 to vector<8x128xf32>
      %c0 = arith.constant 0 : index
      %c0_6 = arith.constant 0 : index
      %17 = vector.load %arg5[%c0, %c0_6] : memref<8x128xf32, #tpu.memory_space<vmem>>, vector<8x128xf32>
      tpu.vector_store %arg5[%c0, %c0_6], %16 {strides = array<i32>} : memref<8x128xf32, #tpu.memory_space<vmem>>, vector<8x128xf32>,
    } else {
    }
    %c1_i32_1 = arith.constant 1 : i32
    %5 = arith.cmpi slt, %1, %c1_i32_1 : i32
    %c1_i32_2 = arith.constant 1 : i32
    %6 = arith.addi %1, %c1_i32_2 : i32
    %c16_i32 = arith.constant 16 : i32
    %7 = arith.muli %6, %c16_i32 : i32
    %c16_i32_3 = arith.constant 16 : i32
    %8 = arith.cmpi sgt, %7, %c16_i32_3 : i32
    %true = arith.constant true
    %9 = arith.xori %8, %true : i1
    %10 = arith.andi %5, %9 : i1
    %11 = arith.extui %10 : i1 to i32
    %c0_i32_4 = arith.constant 0 : i32
    %12 = arith.cmpi ne, %11, %c0_i32_4 : i32
    scf.if %12 {
      %c0 = arith.constant 0 : index
      %c0_6 = arith.constant 0 : index
      %16 = vector.load %arg2[%c0, %c0_6] : memref<16x128xf32, #tpu.memory_space<vmem>>, vector<16x128xf32>
      %c0_7 = arith.constant 0 : index
      %c0_8 = arith.constant 0 : index
      %17 = vector.load %arg3[%c0_7, %c0_8] : memref<16x128xf32, #tpu.memory_space<vmem>>, vector<16x128xf32>
      %c0_9 = arith.constant 0 : index
      %c0_10 = arith.constant 0 : index
      %18 = vector.load %arg4[%c0_9, %c0_10] : memref<16x128xf32, #tpu.memory_space<vmem>>, vector<16x128xf32>
      %19 = arith.subf %17, %16 : vector<16x128xf32>
      %20 = math.absf %19 : vector<16x128xf32>
      %21 = math.absf %18 : vector<16x128xf32>
      %22 = arith.maximumf %20, %21 : vector<16x128xf32>
      %cst = arith.constant 8.000000e-01 : f32
      %23 = vector.broadcast %cst : f32 to vector<16x128xf32>
      %24 = arith.mulf %23, %18 : vector<16x128xf32>
      %25 = arith.subf %22, %24 : vector<16x128xf32>
      %c0_11 = arith.constant 0 : index
      %c0_12 = arith.constant 0 : index
      %26 = vector.load %arg5[%c0_11, %c0_12] : memref<8x128xf32, #tpu.memory_space<vmem>>, vector<8x128xf32>
      %27 = vector.shape_cast %25 : vector<16x128xf32> to vector<2x8x128xf32>
      %cst_13 = arith.constant dense<0.000000e+00> : vector<8x128xf32>
      %28 = vector.multi_reduction <add>, %27, %cst_13 [0] : vector<2x8x128xf32> to vector<8x128xf32>
      %29 = arith.addf %26, %28 : vector<8x128xf32>
      %c0_14 = arith.constant 0 : index
      %c0_15 = arith.constant 0 : index
      %30 = vector.load %arg5[%c0_14, %c0_15] : memref<8x128xf32, #tpu.memory_space<vmem>>, vector<8x128xf32>
      tpu.vector_store %arg5[%c0_14, %c0_15], %29 {strides = array<i32>} : memref<8x128xf32, #tpu.memory_space<vmem>>, vector<8x128xf32>,
    } else {
    }
    %13 = arith.andi %5, %8 : i1
    %14 = arith.extui %13 : i1 to i32
    %c0_i32_5 = arith.constant 0 : i32
    %15 = arith.cmpi ne, %14, %c0_i32_5 : i32
    scf.if %15 {
      %c0 = arith.constant 0 : index
      %c0_6 = arith.constant 0 : index
      %16 = vector.load %arg2[%c0, %c0_6] : memref<16x128xf32, #tpu.memory_space<vmem>>, vector<16x128xf32>
      %c0_7 = arith.constant 0 : index
      %c0_8 = arith.constant 0 : index
      %17 = vector.load %arg3[%c0_7, %c0_8] : memref<16x128xf32, #tpu.memory_space<vmem>>, vector<16x128xf32>
      %c0_9 = arith.constant 0 : index
      %c0_10 = arith.constant 0 : index
      %18 = vector.load %arg4[%c0_9, %c0_10] : memref<16x128xf32, #tpu.memory_space<vmem>>, vector<16x128xf32>
      %19 = arith.subf %17, %16 : vector<16x128xf32>
      %20 = math.absf %19 : vector<16x128xf32>
      %21 = math.absf %18 : vector<16x128xf32>
      %22 = arith.maximumf %20, %21 : vector<16x128xf32>
      %cst = arith.constant 8.000000e-01 : f32
      %23 = vector.broadcast %cst : f32 to vector<16x128xf32>
      %24 = arith.mulf %23, %18 : vector<16x128xf32>
      %25 = arith.subf %22, %24 : vector<16x128xf32>
      %26 = tpu.iota {dimensions = array<i32: 0>} : vector<16x128xi32>
      %c16_i32_11 = arith.constant 16 : i32
      %27 = arith.muli %1, %c16_i32_11 : i32
      %28 = vector.broadcast %27 : i32 to vector<16x128xi32>
      %29 = arith.addi %28, %26 : vector<16x128xi32>
      %c16_i32_12 = arith.constant 16 : i32
      %30 = vector.broadcast %c16_i32_12 : i32 to vector<16x128xi32>
      %31 = arith.cmpi slt, %29, %30 : vector<16x128xi32>
      %cst_13 = arith.constant 0.000000e+00 : f32
      %32 = vector.broadcast %cst_13 : f32 to vector<16x128xf32>
      %33 = arith.select %31, %25, %32 : vector<16x128xi1>, vector<16x128xf32>
      %c0_14 = arith.constant 0 : index
      %c0_15 = arith.constant 0 : index
      %34 = vector.load %arg5[%c0_14, %c0_15] : memref<8x128xf32, #tpu.memory_space<vmem>>, vector<8x128xf32>
      %35 = vector.shape_cast %33 : vector<16x128xf32> to vector<2x8x128xf32>
      %cst_16 = arith.constant dense<0.000000e+00> : vector<8x128xf32>
      %36 = vector.multi_reduction <add>, %35, %cst_16 [0] : vector<2x8x128xf32> to vector<8x128xf32>
      %37 = arith.addf %34, %36 : vector<8x128xf32>
      %c0_17 = arith.constant 0 : index
      %c0_18 = arith.constant 0 : index
      %38 = vector.load %arg5[%c0_17, %c0_18] : memref<8x128xf32, #tpu.memory_space<vmem>>, vector<8x128xf32>
      tpu.vector_store %arg5[%c0_17, %c0_18], %37 {strides = array<i32>} : memref<8x128xf32, #tpu.memory_space<vmem>>, vector<8x128xf32>,
    } else {
    }
    return
  }
  func.func @transform_0(%arg0: i32, %arg1: i32) -> (i32, i32) {
    %c1_i32 = arith.constant 1 : i32
    %0 = arith.muli %arg0, %c1_i32 : i32
    %1 = arith.addi %0, %arg1 : i32
    %c0_i32 = arith.constant 0 : i32
    %2 = arith.minsi %1, %c0_i32 : i32
    %c0_i32_0 = arith.constant 0 : i32
    %c0_i32_1 = arith.constant 0 : i32
    return %2, %c0_i32_0 : i32, i32
  }
  func.func @transform_1(%arg0: i32, %arg1: i32) -> (i32, i32) {
    %c1_i32 = arith.constant 1 : i32
    %0 = arith.muli %arg0, %c1_i32 : i32
    %1 = arith.addi %0, %arg1 : i32
    %c0_i32 = arith.constant 0 : i32
    %2 = arith.minsi %1, %c0_i32 : i32
    %c0_i32_0 = arith.constant 0 : i32
    %c0_i32_1 = arith.constant 0 : i32
    return %2, %c0_i32_0 : i32, i32
  }
  func.func @transform_2(%arg0: i32, %arg1: i32) -> (i32, i32) {
    %c1_i32 = arith.constant 1 : i32
    %0 = arith.muli %arg0, %c1_i32 : i32
    %1 = arith.addi %0, %arg1 : i32
    %c0_i32 = arith.constant 0 : i32
    %2 = arith.minsi %1, %c0_i32 : i32
    %c0_i32_0 = arith.constant 0 : i32
    %c0_i32_1 = arith.constant 0 : i32
    return %2, %c0_i32_0 : i32, i32
  }
  func.func @transform_3(%arg0: i32, %arg1: i32) -> (i32, i32) {
    %c0_i32 = arith.constant 0 : i32
    %c0_i32_0 = arith.constant 0 : i32
    return %arg0, %c0_i32 : i32, i32
  }
}

</mosaic_0001>

<llo_original>
// kernel: tpu_custom_call.1
$region0: #{tpu_custom_call.1}
  #allocation0 [shape = 'u32[]', space=smem, size = 0x4, offset = 0x4, fixed_abs, tag = 'smem constant byte address 0x4 - core index']
  #allocation1 [shape = 'u32[144,128]{1,0:T(1,128)}', space=vmem, size = 0x12000, scoped, tag = 'internal scratch']
  %s0 = inlined_call_operand.hbm [shape: f32[16,128], index: 0, kind: input, shape index: {}]
  %s1 = inlined_call_operand.hbm [shape: f32[16,128], index: 1, kind: input, shape index: {}]
  %s2 = inlined_call_operand.hbm [shape: f32[16,128], index: 2, kind: input, shape index: {}]
  %s3 = inlined_call_operand.hbm [shape: f32[8,128], index: 3, kind: output, shape index: {}]
  %s4 = sld [smem:[#allocation0]]
  $region46: #{tpu_custom_call.1} parent=0
    _
  %s6 = ssub.s32 1, %s4
  %s7 = scalar_select 0, %s6, %s4
  $region1: #{tpu_custom_call.1} parent=0
    #allocation2 [shape = 'u8[8192]{0}', space=vmem, size = 0x2000, scoped, tag = 'input window, operand 0, single buffered']
    #allocation3 [shape = 's32[1]{0}', space=sflag, size = 0x4, scoped, tag = 'scoped memory for tpu_custom_call.1']
    #allocation4 [shape = 's32[1]{0}', space=sflag, size = 0x4, scoped, tag = 'scoped memory for tpu_custom_call.1']
    #allocation5 [shape = 'u8[8192]{0}', space=vmem, size = 0x2000, scoped, tag = 'input window, operand 1, single buffered']
    #allocation6 [shape = 's32[1]{0}', space=sflag, size = 0x4, scoped, tag = 'scoped memory for tpu_custom_call.1']
    #allocation7 [shape = 'u8[8192]{0}', space=vmem, size = 0x2000, scoped, tag = 'input window, operand 2, single buffered']
    #allocation8 [shape = 'u8[4096]{0}', space=vmem, size = 0x1000, scoped, tag = 'output window, operand 0, single buffered']
    %8 = vsyncpa [#allocation3], 0
    %9 = vsyncpa [#allocation6], 0
    %10 = vsyncpa [#allocation4], 0
    // Predicated region
    $region2: #{tpu_custom_call.1} parent=1 // pred_check
      _
    $region3: #{tpu_custom_call.1} parent=1 // pred_check_branch
      %12 = sbr.rel (0) target = $region5
    $region4: #{tpu_custom_call.1} parent=1 // pred_region
      %s13 = sadd.s32 0, 0
      %p14 = scmp.lt.s32.totalorder %s13, 0
      %s15 = scalar_select %p14, %s13, 0
      %s16 = smul.u32 2, %s15
      %s18 = ssub.s32 256, 256
      %19 = vsyncadd [#allocation3], %s18
      %s20 = smul.addr %s16, 128
      %s21 = scalar_lea.hbm %s0, %s20
      %s22 = sshll.u32 [#allocation2], 4
      %s23 = int_to_ptr.vmem [resolvable:$true] %s22
      %28 = dma.hbm_to_vmem [thread:$0]  %s21, 256, %s23, [#allocation3], 128, 128, 8
    $region5: #{tpu_custom_call.1} parent=1 // pred_fallthru
      _
    // Predicated region
    $region6: #{tpu_custom_call.1} parent=1 // pred_check
      _
    $region7: #{tpu_custom_call.1} parent=1 // pred_check_branch
      %30 = sbr.rel (0) target = $region9
    $region8: #{tpu_custom_call.1} parent=1 // pred_region
      %s31 = sadd.s32 0, 0
      %p32 = scmp.lt.s32.totalorder %s31, 0
      %s33 = scalar_select %p32, %s31, 0
      %s34 = smul.u32 2, %s33
      %s36 = ssub.s32 256, 256
      %37 = vsyncadd [#allocation6], %s36
      %s38 = smul.addr %s34, 128
      %s39 = scalar_lea.hbm %s1, %s38
      %s40 = sshll.u32 [#allocation5], 4
      %s41 = int_to_ptr.vmem [resolvable:$true] %s40
      %46 = dma.hbm_to_vmem [thread:$0]  %s39, 256, %s41, [#allocation6], 128, 128, 8
    $region9: #{tpu_custom_call.1} parent=1 // pred_fallthru
      _
    // Predicated region
    $region10: #{tpu_custom_call.1} parent=1 // pred_check
      _
    $region11: #{tpu_custom_call.1} parent=1 // pred_check_branch
      %48 = sbr.rel (0) target = $region13
    $region12: #{tpu_custom_call.1} parent=1 // pred_region
      %s49 = sadd.s32 0, 0
      %p50 = scmp.lt.s32.totalorder %s49, 0
      %s51 = scalar_select %p50, %s49, 0
      %s52 = smul.u32 2, %s51
      %s54 = ssub.s32 256, 256
      %55 = vsyncadd [#allocation6], %s54
      %s56 = smul.addr %s52, 128
      %s57 = scalar_lea.hbm %s2, %s56
      %s58 = sshll.u32 [#allocation7], 4
      %s59 = int_to_ptr.vmem [resolvable:$true] %s58
      %64 = dma.hbm_to_vmem [thread:$0]  %s57, 256, %s59, [#allocation6], 128, 128, 8
    $region13: #{tpu_custom_call.1} parent=1 // pred_fallthru
      _
    // Predicated region
    $region14: #{tpu_custom_call.1} parent=1 // pred_check
      _
    $region15: #{tpu_custom_call.1} parent=1 // pred_check_branch
      %66 = sbr.rel (0) target = $region17
    $region16: #{tpu_custom_call.1} parent=1 // pred_region
      %67 = dma.done [#allocation3], 256
    $region17: #{tpu_custom_call.1} parent=1 // pred_fallthru
      _
    // Predicated region
    $region18: #{tpu_custom_call.1} parent=1 // pred_check
      _
    $region19: #{tpu_custom_call.1} parent=1 // pred_check_branch
      %69 = sbr.rel (0) target = $region21
    $region20: #{tpu_custom_call.1} parent=1 // pred_region
      %70 = dma.done [#allocation6], 256
    $region21: #{tpu_custom_call.1} parent=1 // pred_fallthru
      _
    // Predicated region
    $region22: #{tpu_custom_call.1} parent=1 // pred_check
      _
    $region23: #{tpu_custom_call.1} parent=1 // pred_check_branch
      %72 = sbr.rel (0) target = $region25
    $region24: #{tpu_custom_call.1} parent=1 // pred_region
      %73 = dma.done [#allocation6], 256
    $region25: #{tpu_custom_call.1} parent=1 // pred_fallthru
      _
    %s74 = sadd.s32 0, 0
    %p75 = scmp.lt.s32.totalorder %s74, 0
    %s76 = scalar_select %p75, %s74, 0
    %s77 = smul.u32 2, %s76
    %s78 = sadd.s32 0, 0
    %p79 = scmp.lt.s32.totalorder %s78, 0
    %s80 = scalar_select %p79, %s78, 0
    %s81 = smul.u32 2, %s80
    %s82 = sadd.s32 0, 0
    %p83 = scmp.lt.s32.totalorder %s82, 0
    %s84 = scalar_select %p83, %s82, 0
    %s85 = smul.u32 2, %s84
    %s86 = sadd.s32 0, 0
    %p87 = scmp.eq.s32.totalorder 0, 0
    // Predicated region
    $region26: #{tpu_custom_call.1} parent=1 // pred_check
      %p88 = pneg %p87
    $region27: #{tpu_custom_call.1} parent=1 // pred_check_branch
      %90 = sbr.rel (%p88) target = $region29
    $region28: #{tpu_custom_call.1} parent=1 // pred_region
      %91 = vst [vmem:[#allocation8] sm:$0xff] 0.0
    $region29: #{tpu_custom_call.1} parent=1 // pred_fallthru
      _
    %p92 = scmp.lt.s32.totalorder %s86, 1
    %s93 = sadd.s32 %s86, 1
    %s94 = smul.u32 %s93, 16
    %p95 = scmp.gt.s32.totalorder %s94, 16
    %p96 = scmp.le.s32.totalorder %s94, 16
    %p97 = pnand %p92, %p96
    %p98 = pneg %p97
    // Predicated region
    $region30: #{tpu_custom_call.1} parent=1 // pred_check
      _
    $region31: #{tpu_custom_call.1} parent=1 // pred_check_branch
      %100 = sbr.rel (%p97) target = $region33
    $region32: #{tpu_custom_call.1} parent=1 // pred_region
      %v101 = vld [vmem:[#allocation2] sm:$0xff]
      %v102 = vld [vmem:[#allocation2 + $0x8] sm:$0xff]
      %v103 = vld [vmem:[#allocation5] sm:$0xff]
      %v104 = vld [vmem:[#allocation5 + $0x8] sm:$0xff]
      %v105 = vld [vmem:[#allocation7] sm:$0xff]
      %v106 = vld [vmem:[#allocation7 + $0x8] sm:$0xff]
      %v107 = vsub.f32 %v103, %v101
      %v108 = vsub.f32 %v104, %v102
      %v109 = vand.u32 2147483647, %v107
      %v110 = vand.u32 2147483647, %v108
      %v111 = vand.u32 2147483647, %v105
      %v112 = vand.u32 2147483647, %v106
      %v113 = vmax.f32 %v109, %v111
      %v114 = vmax.f32 %v110, %v112
      %v115 = vmul.f32 %v105, 0.8
      %v116 = vmul.f32 %v106, 0.8
      %v117 = vsub.f32 %v113, %v115
      %v118 = vsub.f32 %v114, %v116
      %v119 = vld [vmem:[#allocation8] sm:$0xff]
      %v120 = vadd.f32 %v117, %v118
      %v121 = vadd.f32 %v119, %v120
      %122 = vst [vmem:[#allocation8] sm:$0xff] %v121
    $region33: #{tpu_custom_call.1} parent=1 // pred_fallthru
      _
    %p123 = pnand %p92, %p95
    %p124 = pneg %p123
    // Predicated region
    $region34: #{tpu_custom_call.1} parent=1 // pred_check
      _
    $region35: #{tpu_custom_call.1} parent=1 // pred_check_branch
      %126 = sbr.rel (%p123) target = $region37
    $region36: #{tpu_custom_call.1} parent=1 // pred_region
      %v127 = vld [vmem:[#allocation2] sm:$0xff]
      %v128 = vld [vmem:[#allocation2 + $0x8] sm:$0xff]
      %v129 = vld [vmem:[#allocation5] sm:$0xff]
      %v130 = vld [vmem:[#allocation5 + $0x8] sm:$0xff]
      %v131 = vld [vmem:[#allocation7] sm:$0xff]
      %v132 = vld [vmem:[#allocation7 + $0x8] sm:$0xff]
      %v133 = vsub.f32 %v129, %v127
      %v134 = vsub.f32 %v130, %v128
      %v135 = vand.u32 2147483647, %v133
      %v136 = vand.u32 2147483647, %v134
      %v137 = vand.u32 2147483647, %v131
      %v138 = vand.u32 2147483647, %v132
      %v139 = vmax.f32 %v135, %v137
      %v140 = vmax.f32 %v136, %v138
      %v141 = vmul.f32 %v131, 0.8
      %v142 = vmul.f32 %v132, 0.8
      %v143 = vsub.f32 %v139, %v141
      %v144 = vsub.f32 %v140, %v142
      %v145 = vlaneseq
      %v146 = vshrl.u32 %v145, 7
      %v147 = vadd.s32 %v146, 8
      %s148 = smul.u32 %s86, 16
      %v149 = vstv %s148
      %v150 = vadd.s32 %v149, %v146
      %v151 = vadd.s32 %v149, %v147
      %vm152 = vcmp.lt.s32.totalorder %v150, 16
      %vm153 = vcmp.lt.s32.totalorder %v151, 16
      %v154 = vsel %vm152, %v143, 0.0
      %v155 = vsel %vm153, %v144, 0.0
      %v156 = vld [vmem:[#allocation8] sm:$0xff]
      %v157 = vadd.f32 %v154, %v155
      %v158 = vadd.f32 %v156, %v157
      %159 = vst [vmem:[#allocation8] sm:$0xff] %v158
    $region37: #{tpu_custom_call.1} parent=1 // pred_fallthru
      _
    // Predicated region
    $region38: #{tpu_custom_call.1} parent=1 // pred_check
      _
    $region39: #{tpu_custom_call.1} parent=1 // pred_check_branch
      %161 = sbr.rel (0) target = $region41
    $region40: #{tpu_custom_call.1} parent=1 // pred_region
      %s163 = ssub.s32 128, 128
      %164 = vsyncadd [#allocation4], %s163
      %s166 = sshll.u32 [#allocation8], 4
      %s167 = int_to_ptr.vmem [resolvable:$true] %s166
      %169 = dma.vmem_to_hbm [thread:$0]  %s167, 128, %s3, [#allocation4]
    $region41: #{tpu_custom_call.1} parent=1 // pred_fallthru
      _
    // Predicated region
    $region42: #{tpu_custom_call.1} parent=1 // pred_check
      _
    $region43: #{tpu_custom_call.1} parent=1 // pred_check_branch
      %171 = sbr.rel (0) target = $region45
    $region44: #{tpu_custom_call.1} parent=1 // pred_region
      %172 = dma.done [#allocation4], 128
    $region45: #{tpu_custom_call.1} parent=1 // pred_fallthru
      _
    %173 = vsyncpa [#allocation3], 1
    %174 = vsyncpa [#allocation6], 1
    %175 = vsyncpa [#allocation4], 1

</llo_original>
